<compile_context>
chip_gen: v7x
topology: tpu7x:2x2x1
jax: 0.10.0
libtpu: 0.0.40
codegen_flags: <defaults>
</compile_context>

<pallas_src>
import functools

import jax
import jax.numpy as jnp
import numpy as np
from jax.experimental import pallas as pl
from jax.experimental.pallas import tpu as pltpu


def _round_up(x, m):
    return (x + m - 1) // m * m


# ----------------------------------------------------------------------------
# Pallas kernel: one program = (one batch element, one spatial tile).
#   x_ref : (1, K*K*C_in, TILE_P)   im2col slab (contraction x spatial lanes)
#   w_ref : (2*C_out_p, K*K*C_in)   fused feature+mask weight (rows 0..C_out_p-1
#                                   = feature gate, rows C_out_p.. = mask gate)
#   b_ref : (2*C_out_p, 1)          fused bias (f32)
#   o_ref : (1, C_out_p, TILE_P)    gated output, lane-dense spatial axis
# ----------------------------------------------------------------------------
def _gated_conv_kernel(x_ref, w_ref, b_ref, o_ref, *, c_out_p):
    x = x_ref[0]                                              # (KKC, TILE_P)
    # Single fused contraction -> (2*C_out_p, TILE_P) f32 accumulator.
    acc = jnp.dot(w_ref[...], x, preferred_element_type=jnp.float32)
    acc = acc + b_ref[...]
    # Row split is a free sublane slice (c_out_p % 8 == 0).
    feat = acc[:c_out_p]
    mask = acc[c_out_p:]
    # leaky_relu(feat, 0.2) = max(feat, 0.2*feat); sigmoid via EUP exp + recip.
    gated = jnp.maximum(feat, 0.2 * feat) * pl.reciprocal(
        1.0 + jnp.exp(-mask), approx=True)
    o_ref[0] = gated.astype(o_ref.dtype)


# ----------------------------------------------------------------------------
# One-time parameter preparation (hoisted out of the forward path).
# ----------------------------------------------------------------------------
def spectral_normalize(w_oihw, n_iter=50, eps=1e-12):
    """Divide conv weight by its largest singular value (power iteration),
    matching torch.nn.utils.spectral_norm at inference."""
    # TODO(synk): torch carries a persistent `u` buffer updated once per
    # training step; here we converge from a fixed seed (inference-equivalent).
    out_c = w_oihw.shape[0]
    w_mat = w_oihw.reshape(out_c, -1).astype(jnp.float32)
    u0 = jax.random.normal(jax.random.PRNGKey(1), (out_c,), jnp.float32)
    u0 = u0 / (jnp.linalg.norm(u0) + eps)

    def body(_, u):
        v = w_mat.T @ u
        v = v / (jnp.linalg.norm(v) + eps)
        u = w_mat @ v
        u = u / (jnp.linalg.norm(u) + eps)
        return u

    u = jax.lax.fori_loop(0, n_iter, body, u0)
    v = w_mat.T @ u
    v = v / (jnp.linalg.norm(v) + eps)
    sigma = u @ (w_mat @ v)
    return (w_oihw / sigma).astype(w_oihw.dtype)


def prepare_gated_conv_params(weight_oihw, bias, *, compute_dtype=jnp.bfloat16):
    """Spectral norm + fused/padded matmul layout, done ONCE per weight.
    Weights default to bf16 (full MXU throughput on v6e/v7x, half the DMA);
    bias stays f32 because the accumulator/epilogue are f32."""
    w_sn = spectral_normalize(weight_oihw)
    two_cout, c_in, K, _ = w_sn.shape
    c_out = two_cout // 2
    c_out_p = _round_up(max(c_out, 8), 8)        # sublane-aligned gate halves
    kkc = K * K * c_in
    # OIHW -> (2*C_out, K*K*C_in) with (kh, kw, c_in) contraction ordering.
    w2 = jnp.transpose(w_sn, (0, 2, 3, 1)).reshape(two_cout, kkc)
    w2 = w2.astype(jnp.float32)
    b = bias.astype(jnp.float32)

    w_fused = jnp.zeros((2 * c_out_p, kkc), jnp.float32)
    w_fused = w_fused.at[:c_out].set(w2[:c_out])                       # feature
    w_fused = w_fused.at[c_out_p:c_out_p + c_out].set(w2[c_out:])      # mask
    b_fused = jnp.zeros((2 * c_out_p, 1), jnp.float32)
    b_fused = b_fused.at[:c_out, 0].set(b[:c_out])
    b_fused = b_fused.at[c_out_p:c_out_p + c_out, 0].set(b[c_out:])

    params = {"w": w_fused.astype(compute_dtype), "b": b_fused}
    meta = dict(kernel_size=int(K), in_channels=int(c_in),
                out_channels=int(c_out), out_channels_padded=int(c_out_p))
    return params, meta


def init_gated_conv_params(key, in_channels, out_channels, kernel_size):
    """Deterministic init mirroring nn.Conv2d defaults (uniform +-1/sqrt(fan_in))."""
    k_w, k_b = jax.random.split(key)
    fan_in = in_channels * kernel_size * kernel_size
    bound = 1.0 / np.sqrt(fan_in)
    w = jax.random.uniform(
        k_w, (out_channels * 2, in_channels, kernel_size, kernel_size),
        jnp.float32, minval=-bound, maxval=bound)
    b = jax.random.uniform(
        k_b, (out_channels * 2,), jnp.float32, minval=-bound, maxval=bound)
    return w, b


# ----------------------------------------------------------------------------
# Tiling: VMEM- and dtype-aware, 128-lane aligned, megacore-friendly.
# ----------------------------------------------------------------------------
def _pick_spatial_tile(p_pad, per_lane_bytes, fixed_bytes, n_batch,
                       budget_bytes=24 * 1024 * 1024):
    """Largest multiple-of-128 tile dividing p_pad whose double-buffered
    working set fits the VMEM budget, keeping >=2 programs total so both
    v7x TensorCores get work."""
    cands = [t for t in range(128, p_pad + 1, 128) if p_pad % t == 0]
    max_lanes = max(128, (budget_bytes - fixed_bytes) // max(per_lane_bytes, 1))
    fitting = [t for t in cands if t <= max_lanes] or [cands[0]]
    tile = fitting[-1]
    if n_batch * (p_pad // tile) < 2:
        two_plus = [t for t in fitting if p_pad // t >= 2]
        if two_plus:
            tile = two_plus[-1]
    return tile


# ----------------------------------------------------------------------------
# Forward wrapper: NCHW in / NCHW out.
# ----------------------------------------------------------------------------
def gated_conv(x_nchw, params, *, kernel_size, out_channels, stride=1, padding=0):
    w, b = params["w"], params["b"]
    N, C_in, H, W = x_nchw.shape
    K = kernel_size
    c2p = w.shape[0]                 # 2 * C_out_p (fused, padded)
    c_out_p = c2p // 2
    KKC = K * K * C_in
    assert w.shape[1] == KKC, "weight layout mismatch"

    Ho = (H + 2 * padding - K) // stride + 1
    Wo = (W + 2 * padding - K) // stride + 1
    P = Ho * Wo
    P_pad = _round_up(P, 128)        # lane-dense stores even for e.g. 28*28

    # ---- XLA glue: zero-pad, cast to compute dtype BEFORE the K*K expansion,
    #      then im2col slab with the SPATIAL axis last. -----------------------
    x_pad = jnp.pad(
        x_nchw, ((0, 0), (0, 0), (padding, padding), (padding, padding))
    ).astype(w.dtype)
    taps = []
    for kh in range(K):
        for kw in range(K):
            taps.append(jax.lax.slice(
                x_pad,
                (0, 0, kh, kw),
                (N, C_in, kh + (Ho - 1) * stride + 1, kw + (Wo - 1) * stride + 1),
                (1, 1, stride, stride)))                 # (N, C_in, Ho, Wo)
    x_cols = jnp.stack(taps, axis=1).reshape(N, KKC, P)
    if P_pad != P:
        x_cols = jnp.pad(x_cols, ((0, 0), (0, 0), (0, P_pad - P)))

    # ---- VMEM-aware tile selection & explicit limit -------------------------
    itm_x = jnp.dtype(w.dtype).itemsize
    itm_o = jnp.dtype(x_nchw.dtype).itemsize
    per_lane = (2 * KKC * itm_x            # x tile, double-buffered
                + 2 * c_out_p * itm_o      # out tile, double-buffered
                + (c2p + c_out_p) * 4)     # f32 accumulator + gated temp
    fixed = 2 * c2p * KKC * itm_x + 2 * c2p * 4   # weight + bias buffers
    TILE_P = _pick_spatial_tile(P_pad, per_lane, fixed, N)
    grid = (N, P_pad // TILE_P)
    vmem_limit = int(min(max(fixed + per_lane * TILE_P + (4 << 20), 16 << 20),
                         48 << 20))

    kernel = functools.partial(_gated_conv_kernel, c_out_p=c_out_p)
    out = pl.pallas_call(
        kernel,
        out_shape=jax.ShapeDtypeStruct((N, c_out_p, P_pad), x_nchw.dtype),
        grid_spec=pltpu.PrefetchScalarGridSpec(
            num_scalar_prefetch=0,
            grid=grid,
            in_specs=[
                pl.BlockSpec((1, KKC, TILE_P), lambda n, j: (n, 0, j)),
                pl.BlockSpec((c2p, KKC), lambda n, j: (0, 0)),
                pl.BlockSpec((c2p, 1), lambda n, j: (0, 0)),
            ],
            out_specs=pl.BlockSpec((1, c_out_p, TILE_P), lambda n, j: (n, 0, j)),
        ),
        compiler_params=pltpu.CompilerParams(
            dimension_semantics=("parallel", "parallel"),
            vmem_limit_bytes=vmem_limit,
        ),
    )(x_cols, w, b)

    # Output is channel-major already: drop channel/spatial padding, reshape.
    return out[:, :out_channels, :P].reshape(N, out_channels, Ho, Wo)


# ----------------------------------------------------------------------------
# Pure-JAX reference for correctness
# ----------------------------------------------------------------------------
def gated_conv_ref(x_nchw, weight_oihw, bias, *, stride=1, padding=0):
    w_sn = spectral_normalize(weight_oihw)
    y = jax.lax.conv_general_dilated(
        x_nchw, w_sn, (stride, stride),
        [(padding, padding), (padding, padding)],
        dimension_numbers=("NCHW", "OIHW", "NCHW"))
    y = y + bias[None, :, None, None]
    C_out = w_sn.shape[0] // 2
    feat, mask = y[:, :C_out], y[:, C_out:]
    return jnp.where(feat >= 0, feat, 0.2 * feat) * jax.nn.sigmoid(mask)


if __name__ == "__main__":
    # Small shapes consistent with the module: N=2, C_in=4, H=W=16,
    # out_channels=4, kernel_size=3, stride=1, padding=1.
    N, C_in, H, W = 2, 4, 16, 16
    C_out, K, stride, padding = 4, 3, 1, 1

    key = jax.random.PRNGKey(0)
    kx, kp = jax.random.split(key)
    x = jax.random.normal(kx, (N, C_in, H, W), jnp.float32)
    w, b = init_gated_conv_params(kp, C_in, C_out, K)

    # One-time parameter prep (spectral norm + fused bf16 layout + padding).
    params, meta = prepare_gated_conv_params(w, b)   # compute_dtype=bf16

    fwd = jax.jit(functools.partial(
        gated_conv,
        kernel_size=meta["kernel_size"],
        out_channels=meta["out_channels"],
        stride=stride, padding=padding))
    out = jax.block_until_ready(fwd(x, params))

    ref = gated_conv_ref(x, w, b, stride=stride, padding=padding)
    # bf16 MXU inputs with f32 accumulation vs a pure-f32 reference.
    np.testing.assert_allclose(np.asarray(out), np.asarray(ref),
                               atol=5e-2, rtol=5e-2)

    print("KERNEL_OK")
</pallas_src>

<mosaic_0001>
module attributes {stable_mosaic.version = 11 : i64} {
  func.func @_gated_conv_kernel(%arg0: i32, %arg1: i32, %arg2: memref<1x36x256xbf16, #tpu.memory_space<vmem>>, %arg3: memref<16x36xbf16, #tpu.memory_space<vmem>>, %arg4: memref<16x1xf32, #tpu.memory_space<vmem>>, %arg5: memref<1x8x256xf32, #tpu.memory_space<vmem>>) attributes {dimension_semantics = [#tpu.dimension_semantics<parallel>, #tpu.dimension_semantics<parallel>], iteration_bounds = array<i64: 2, 1>, scalar_prefetch = 0 : i64, scratch_operands = 0 : i64, tpu.core_type = #tpu.core_type<tc>, window_params = [{transform_indices = @transform_0, window_bounds = array<i64: 1, 36, 256>}, {pipeline_mode = #tpu.pipeline_mode<synchronous>, transform_indices = @transform_1, window_bounds = array<i64: 16, 36>}, {pipeline_mode = #tpu.pipeline_mode<synchronous>, transform_indices = @transform_2, window_bounds = array<i64: 16, 1>}, {transform_indices = @transform_3, window_bounds = array<i64: 1, 8, 256>}]} {
    %c0 = arith.constant 0 : index
    %c0_0 = arith.constant 0 : index
    %c0_1 = arith.constant 0 : index
    %0 = vector.load %arg2[%c0, %c0_0, %c0_1] : memref<1x36x256xbf16, #tpu.memory_space<vmem>>, vector<1x36x256xbf16>
    %1 = vector.shape_cast %0 : vector<1x36x256xbf16> to vector<36x256xbf16>
    %c0_2 = arith.constant 0 : index
    %c0_3 = arith.constant 0 : index
    %2 = vector.load %arg3[%c0_2, %c0_3] : memref<16x36xbf16, #tpu.memory_space<vmem>>, vector<16x36xbf16>
    %cst = arith.constant dense<0.000000e+00> : vector<16x256xf32>
    %3 = tpu.matmul %2, %1, %cst {dimension_numbers = #tpu.dot_dimension_numbers<[1], [0], [0], [1], [0, 0, 1, 1], [], []>} : vector<16x36xbf16>, vector<36x256xbf16>, vector<16x256xf32> -> vector<16x256xf32>
    %c0_4 = arith.constant 0 : index
    %c0_5 = arith.constant 0 : index
    %4 = vector.load %arg4[%c0_4, %c0_5] : memref<16x1xf32, #tpu.memory_space<vmem>>, vector<16x1xf32>
    %5 = vector.broadcast %4 : vector<16x1xf32> to vector<16x256xf32>
    %6 = arith.addf %3, %5 : vector<16x256xf32>
    %7 = vector.extract_strided_slice %6 {offsets = [0, 0], sizes = [8, 256], strides = [1, 1]} : vector<16x256xf32> to vector<8x256xf32>
    %8 = vector.extract_strided_slice %6 {offsets = [8, 0], sizes = [8, 256], strides = [1, 1]} : vector<16x256xf32> to vector<8x256xf32>
    %cst_6 = arith.constant 2.000000e-01 : f32
    %9 = vector.broadcast %cst_6 : f32 to vector<8x256xf32>
    %10 = arith.mulf %9, %7 : vector<8x256xf32>
    %11 = arith.maximumf %7, %10 : vector<8x256xf32>
    %cst_7 = arith.constant 0.000000e+00 : f32
    %12 = vector.broadcast %cst_7 : f32 to vector<8x256xf32>
    %13 = arith.subf %12, %8 : vector<8x256xf32>
    %14 = math.exp %13 : vector<8x256xf32>
    %cst_8 = arith.constant 1.000000e+00 : f32
    %15 = vector.broadcast %cst_8 : f32 to vector<8x256xf32>
    %16 = arith.addf %15, %14 : vector<8x256xf32>
    %17 = tpu.reciprocal %16 {approx = true} : vector<8x256xf32> -> vector<8x256xf32>
    %18 = arith.mulf %11, %17 : vector<8x256xf32>
    %c0_9 = arith.constant 0 : index
    %c0_10 = arith.constant 0 : index
    %c0_11 = arith.constant 0 : index
    %19 = vector.load %arg5[%c0_9, %c0_10, %c0_11] : memref<1x8x256xf32, #tpu.memory_space<vmem>>, vector<1x8x256xf32>
    %20 = vector.shape_cast %19 : vector<1x8x256xf32> to vector<8x256xf32>
    %21 = vector.shape_cast %18 : vector<8x256xf32> to vector<1x8x256xf32>
    tpu.vector_store %arg5[%c0_9, %c0_10, %c0_11], %21 {strides = array<i32>} : memref<1x8x256xf32, #tpu.memory_space<vmem>>, vector<1x8x256xf32>,
    return
  }
  func.func @transform_0(%arg0: i32, %arg1: i32) -> (i32, i32, i32) {
    %c0_i32 = arith.constant 0 : i32
    %c0_i32_0 = arith.constant 0 : i32
    return %arg0, %c0_i32, %arg1 : i32, i32, i32
  }
  func.func @transform_1(%arg0: i32, %arg1: i32) -> (i32, i32) {
    %c0_i32 = arith.constant 0 : i32
    %c0_i32_0 = arith.constant 0 : i32
    %c0_i32_1 = arith.constant 0 : i32
    return %c0_i32, %c0_i32_0 : i32, i32
  }
  func.func @transform_2(%arg0: i32, %arg1: i32) -> (i32, i32) {
    %c0_i32 = arith.constant 0 : i32
    %c0_i32_0 = arith.constant 0 : i32
    %c0_i32_1 = arith.constant 0 : i32
    return %c0_i32, %c0_i32_0 : i32, i32
  }
  func.func @transform_3(%arg0: i32, %arg1: i32) -> (i32, i32, i32) {
    %c0_i32 = arith.constant 0 : i32
    %c0_i32_0 = arith.constant 0 : i32
    return %arg0, %c0_i32, %arg1 : i32, i32, i32
  }
}

</mosaic_0001>

<llo_original>
// kernel: gated_conv.1
$region0: #{gated_conv.1}
  #allocation0 [shape = 'u32[]', space=smem, size = 0x4, offset = 0x4, fixed_abs, tag = 'smem constant byte address 0x4 - core index']
  #allocation1 [shape = 'u32[144,128]{1,0:T(1,128)}', space=vmem, size = 0x12000, scoped, tag = 'internal scratch']
  %s0 = inlined_call_operand.vmem [shape: bf16[2,36,256], index: 0, kind: input, shape index: {}]
  %s1 = inlined_call_operand.vmem [shape: bf16[16,36], index: 1, kind: input, shape index: {}]
  %s2 = inlined_call_operand.vmem [shape: f32[16,1], index: 2, kind: input, shape index: {}]
  %s3 = inlined_call_operand.vmem [shape: f32[2,8,256], index: 3, kind: output, shape index: {}]
  %s4 = sld [smem:[#allocation0]]
  $region45: #{gated_conv.1} parent=0
    _
  %s6 = ssub.s32 1, %s4
  %s7 = scalar_select 0, %s6, %s4
  loop: start=0, step=1, limit=4
  $region2: #{gated_conv.1} parent=0 // loop_pre_header
    _
  $region3: #{gated_conv.1} parent=0 // loop_header
    %s9 = sphi 0, %s13
    %p10 = scmp.ge.s32.totalorder %s9, 4
    %s16 = sphi 0, %s28
    %s17 = sphi 0, %s24
    %s18 = sphi 0, %s16
    %s19 = sphi 0, %s17
    %s20 = sphi 0, %s18
    %s21 = sphi 0, %s19
    %s33 = sphi 0, %s35
    %s36 = sphi 0, %s33
    %s37 = sphi 0, %s36
    %s53 = sphi 0, %s37
    %s57 = sphi 0, %s57
    %s59 = sphi 0, %s57
    %s60 = sphi 0, %s59
    %s74 = sphi 0, %s60
    %s78 = sphi 0, %s78
    %s80 = sphi 0, %s78
    %s81 = sphi 0, %s80
    %s95 = sphi 0, %s81
    %s103 = sphi 0, %s105
    %s106 = sphi 0, %s103
    %s107 = sphi 0, %s106
    %s123 = sphi 0, %s107
  $region4: #{gated_conv.1} parent=0 // loop_header_branch
    %12 = sbr.rel (%p10) target = $region8
  $region5: #{gated_conv.1} parent=0 // loop_body
    %s14 = ssub.s32 %s9, 1
    %s15 = ssub.s32 %s9, 2
    %s22 = sadd.s32 1, %s17
    %p23 = scmp.ge.s32.totalorder %s22, 1
    %s24 = scalar_select %p23, 0, %s22
    %s25 = sadd.s32 1, %s16
    %s26 = scalar_select %p23, %s25, %s16
    %p27 = scmp.ge.s32.totalorder %s26, 2
    %s28 = scalar_select %p27, 0, %s26
    %s29 = ssub.s32 %s16, %s28
    %s30 = ssub.s32 %s17, %s24
    %s31 = sor.u32 %s29, %s30
    %p32 = scmp.eq.s32.totalorder %s31, 0
    %s34 = sadd.s32 %s33, 1
    %s35 = scalar_select %p32, %s33, %s34
    %p38 = pneg %p32
    %p39 = scmp.eq.s32.totalorder %s9, 1
    %p40 = por %p38, %p39
    %p41 = scmp.ne.s32.totalorder %s33, %s36
    %p42 = scmp.eq.s32.totalorder %s9, 0
    %p43 = por %p41, %p42
    %p44 = scmp.ne.s32.totalorder %s33, %s36
    %p45 = scmp.eq.s32.totalorder %s14, 1
    %p46 = por %p44, %p45
    %p47 = scmp.ne.s32.totalorder %s36, %s37
    %p48 = scmp.eq.s32.totalorder %s14, 0
    %p49 = por %p47, %p48
    %p50 = scmp.ne.s32.totalorder %s36, %s37
    %p51 = scmp.eq.s32.totalorder %s15, 1
    %p52 = por %p50, %p51
    %p54 = scmp.ne.s32.totalorder %s37, %s53
    %p55 = scmp.eq.s32.totalorder %s15, 0
    %p56 = por %p54, %p55
    %s58 = sadd.s32 %s57, 1
    %p61 = scmp.eq.s32.totalorder %s9, 1
    %p62 = scmp.ne.s32.totalorder %s57, %s59
    %p63 = scmp.eq.s32.totalorder %s9, 0
    %p64 = por %p62, %p63
    %p65 = scmp.ne.s32.totalorder %s57, %s59
    %p66 = scmp.eq.s32.totalorder %s14, 1
    %p67 = por %p65, %p66
    %p68 = scmp.ne.s32.totalorder %s59, %s60
    %p69 = scmp.eq.s32.totalorder %s14, 0
    %p70 = por %p68, %p69
    %p71 = scmp.ne.s32.totalorder %s59, %s60
    %p72 = scmp.eq.s32.totalorder %s15, 1
    %p73 = por %p71, %p72
    %p75 = scmp.ne.s32.totalorder %s60, %s74
    %p76 = scmp.eq.s32.totalorder %s15, 0
    %p77 = por %p75, %p76
    %s79 = sadd.s32 %s78, 1
    %p82 = scmp.eq.s32.totalorder %s9, 1
    %p83 = scmp.ne.s32.totalorder %s78, %s80
    %p84 = scmp.eq.s32.totalorder %s9, 0
    %p85 = por %p83, %p84
    %p86 = scmp.ne.s32.totalorder %s78, %s80
    %p87 = scmp.eq.s32.totalorder %s14, 1
    %p88 = por %p86, %p87
    %p89 = scmp.ne.s32.totalorder %s80, %s81
    %p90 = scmp.eq.s32.totalorder %s14, 0
    %p91 = por %p89, %p90
    %p92 = scmp.ne.s32.totalorder %s80, %s81
    %p93 = scmp.eq.s32.totalorder %s15, 1
    %p94 = por %p92, %p93
    %p96 = scmp.ne.s32.totalorder %s81, %s95
    %p97 = scmp.eq.s32.totalorder %s15, 0
    %p98 = por %p96, %p97
    %s99 = ssub.s32 %s16, %s28
    %s100 = ssub.s32 %s17, %s24
    %s101 = sor.u32 %s99, %s100
    %p102 = scmp.eq.s32.totalorder %s101, 0
    %s104 = sadd.s32 %s103, 1
    %s105 = scalar_select %p102, %s103, %s104
    %p108 = pneg %p102
    %p109 = scmp.eq.s32.totalorder %s9, 1
    %p110 = por %p108, %p109
    %p111 = scmp.ne.s32.totalorder %s103, %s106
    %p112 = scmp.eq.s32.totalorder %s9, 0
    %p113 = por %p111, %p112
    %p114 = scmp.ne.s32.totalorder %s103, %s106
    %p115 = scmp.eq.s32.totalorder %s14, 1
    %p116 = por %p114, %p115
    %p117 = scmp.ne.s32.totalorder %s106, %s107
    %p118 = scmp.eq.s32.totalorder %s14, 0
    %p119 = por %p117, %p118
    %p120 = scmp.ne.s32.totalorder %s106, %s107
    %p121 = scmp.eq.s32.totalorder %s15, 1
    %p122 = por %p120, %p121
    %p124 = scmp.ne.s32.totalorder %s107, %s123
    %p125 = scmp.eq.s32.totalorder %s15, 0
    %p126 = por %p124, %p125
    %p127 = scmp.le.s32.totalorder 1, %s9
    %p128 = scmp.lt.s32.totalorder %s9, 3
    %p129 = pnand %p127, %p128
    %p130 = pneg %p129
    // Predicated region
    $region9: #{gated_conv.1} parent=5 // pred_check
      _
    $region10: #{gated_conv.1} parent=5 // pred_check_branch
      %132 = sbr.rel (%p129) target = $region12
    $region11: #{gated_conv.1} parent=5 // pred_region
      %s133 = ssub.s32 %s9, 1
      // Predicated region
      $region13: #{gated_conv.1} parent=11 // pred_check
        %p134 = pneg %p70
      $region14: #{gated_conv.1} parent=11 // pred_check_branch
        %136 = sbr.rel (%p134) target = $region16
      $region15: #{gated_conv.1} parent=11 // pred_region
        _
      $region16: #{gated_conv.1} parent=11 // pred_fallthru
        _
      // Predicated region
      $region17: #{gated_conv.1} parent=11 // pred_check
        %p137 = pneg %p91
      $region18: #{gated_conv.1} parent=11 // pred_check_branch
        %139 = sbr.rel (%p137) target = $region20
      $region19: #{gated_conv.1} parent=11 // pred_region
        _
      $region20: #{gated_conv.1} parent=11 // pred_fallthru
        _
    $region12: #{gated_conv.1} parent=5 // pred_fallthru
      _
    %p140 = scmp.lt.s32.totalorder %s9, 2
    // Predicated region
    $region21: #{gated_conv.1} parent=5 // pred_check
      %p141 = pneg %p140
    $region22: #{gated_conv.1} parent=5 // pred_check_branch
      %143 = sbr.rel (%p141) target = $region24
    $region23: #{gated_conv.1} parent=5 // pred_region
      // Predicated region
      $region25: #{gated_conv.1} parent=23 // pred_check
        %p144 = pneg %p43
      $region26: #{gated_conv.1} parent=23 // pred_check_branch
        %146 = sbr.rel (%p144) target = $region28
      $region27: #{gated_conv.1} parent=23 // pred_region
        %s147 = smul.u32 2, %s17
        %p148 = scmp.lt.s32.totalorder %s16, 1
        %s149 = scalar_select %p148, %s16, 1
        %p150 = scmp.lt.s32.totalorder %s147, 1
        %s151 = scalar_select %p150, %s147, 1
        %s152 = smul.addr %s149, 10
        %s153 = sadd.s32 %s151, %s152
        %s154 = smul.addr %s153, 4
        %s155 = scalar_lea.vmem %s0, %s154
        %s156 = smul.u32 2, %s17
      $region28: #{gated_conv.1} parent=23 // pred_fallthru
        _
    $region24: #{gated_conv.1} parent=5 // pred_fallthru
      _
    %p157 = scmp.le.s32.totalorder 1, %s9
    %p158 = scmp.lt.s32.totalorder %s9, 3
    %p159 = pnand %p157, %p158
    %p160 = pneg %p159
    // Predicated region
    $region29: #{gated_conv.1} parent=5 // pred_check
      _
    $region30: #{gated_conv.1} parent=5 // pred_check_branch
      %162 = sbr.rel (%p159) target = $region32
    $region31: #{gated_conv.1} parent=5 // pred_region
      %s163 = ssub.s32 %s9, 1
      %s164 = smul.u32 2, %s19
      %p165 = scmp.lt.s32.totalorder %s18, 1
      %s166 = scalar_select %p165, %s18, 1
      %p167 = scmp.lt.s32.totalorder %s164, 1
      %s168 = scalar_select %p167, %s164, 1
      %s169 = smul.addr %s166, 10
      %s170 = sadd.s32 %s168, %s169
      %s171 = smul.addr %s170, 4
      %s172 = scalar_lea.vmem %s0, %s171
      %p173 = pneg %p49
      %p174 = pneg %p46
      %p175 = pneg %p70
      %p176 = pneg %p67
      %p177 = pneg %p91
      %p178 = pneg %p88
      %p179 = pneg %p119
      %p180 = pneg %p116
      %s181 = smul.u32 2, %s19
      %p182 = scmp.lt.s32.totalorder %s18, 1
      %s183 = scalar_select %p182, %s18, 1
      %p184 = scmp.lt.s32.totalorder %s181, 1
      %s185 = scalar_select %p184, %s181, 1
      %s186 = smul.addr %s183, 2
      %s187 = sadd.s32 %s185, %s186
      %s188 = smul.addr %s187, 8
      %s189 = scalar_lea.vmem %s3, %s188
      %s190 = smul.u32 2, %s19
      %p191 = scmp.lt.s32.totalorder %s18, 1
      %s192 = scalar_select %p191, %s18, 1
      %p193 = scmp.lt.s32.totalorder %s190, 1
      %s194 = scalar_select %p193, %s190, 1
      %s195 = smul.addr %s192, 10
      %s196 = sadd.s32 %s194, %s195
      %s197 = smul.addr %s196, 4
      %s198 = scalar_lea.vmem %s0, %s197
      %s199 = smul.u32 2, %s19
      %s200 = smul.u32 2, %s19
      %p201 = scmp.lt.s32.totalorder %s18, 1
      %s202 = scalar_select %p201, %s18, 1
      %p203 = scmp.lt.s32.totalorder %s200, 1
      %s204 = scalar_select %p203, %s200, 1
      %s205 = smul.addr %s202, 2
      %s206 = sadd.s32 %s204, %s205
      %s207 = smul.addr %s206, 8
      %s208 = scalar_lea.vmem %s3, %s207
      %s209 = smul.u32 2, %s19
      %v211 = vld [vmem:[%s198] sm:$0xff]
      %v212 = vld [vmem:[%s198 + $0x8] sm:$0xff]
      %v213 = vld [vmem:[%s198 + $0x10] sm:$0xff]
      %v214 = vld [vmem:[%s198 + $0x18] sm:$0xff]
      %v215 = vld [vmem:[%s198 + $0x20] sm:$0x33]
      %v216 = vld [vmem:[%s1] sm:$0xf]
      %v217 = vld [vmem:[%s1 + $0x4] sm:$0xf]
      %v218 = vld [vmem:[%s2] sm:$0xff]
      %v219 = vld [vmem:[%s2 + $0x8] sm:$0xff]
      %221 = vset.pattern.permute.xlu0 0
      %222 = vperm.xlu0 %221, %v218
      %v223 = vpop.permute.xlu0 %222
      %226 = vset.pattern.permute.xlu0 0
      %227 = vperm.xlu0 %226, %v219
      %v228 = vpop.permute.xlu0 %227
      %v232 = vunpack.c.l.b16 %v216
      %v233 = vunpack.c.l.b16 %v217
      %v234 = vpack.c.b16 %v233, %v232
      %v240 = vunpack.c.l.b16 %v211
      %v241 = vunpack.c.h.b16 %v211
      %v242 = vunpack.c.l.b16 %v212
      %v243 = vunpack.c.h.b16 %v212
      %v244 = vunpack.c.l.b16 %v213
      %v245 = vunpack.c.h.b16 %v213
      %v246 = vunpack.c.l.b16 %v214
      %v247 = vunpack.c.h.b16 %v214
      %v248 = vunpack.c.l.b16 %v215
      %v249 = vunpack.c.h.b16 %v215
      %v250 = vpack.c.b16 %v242, %v240
      %v251 = vpack.c.b16 %v243, %v241
      %v252 = vpack.c.b16 %v246, %v244
      %v253 = vpack.c.b16 %v247, %v245
      %v254 = vpack.c.b16 %v248, %v248
      %v255 = vpack.c.b16 %v249, %v249
      %vm260 = vcmask 293888
      %v262 = vsel %vm260, %v234, 0
      %vm264 = vcmask 1041408
      %v266 = vsel %vm264, %v254, 0
      %v269 = vsel %vm264, %v255, 0
      %271 = vmatprep.subr.bf16.mxu0 %v251
      %272 = vmatpush1.bf16.msra.mxu0 %v250
      %273 = vmatprep.subr.bf16.mxu0 %v253
      %274 = vmatpush1.bf16.msra.mxu0 %v252
      %275 = vmatprep.subr.bf16.mxu0 %v269
      %276 = vmatpush1.bf16.msra.mxu0 %v266
      %277 = vmatprep.subr.bf16.mxu0 0
      %278 = vmatpush1.bf16.msra.mxu0 0
      %279 = vmatprep.subr.bf16.mxu0 0
      %280 = vmatpush1.bf16.msra.mxu0 0
      %281 = vmatprep.subr.bf16.mxu0 0
      %282 = vmatpush1.bf16.msra.mxu0 0
      %283 = vmatprep.subr.bf16.mxu0 0
      %284 = vmatpush1.bf16.msra.mxu0 0
      %285 = vmatprep.subr.bf16.mxu0 0
      %286 = vmatpush1.bf16.msra.mxu0 0
      %287 = vmatprep.subr.bf16.mxu0 0
      %288 = vmatpush1.bf16.msra.mxu0 0
      %289 = vmatprep.subr.bf16.mxu0 0
      %290 = vmatpush1.bf16.msra.mxu0 0
      %291 = vmatprep.subr.bf16.mxu0 0
      %292 = vmatpush1.bf16.msra.mxu0 0
      %293 = vmatprep.subr.bf16.mxu0 0
      %294 = vmatpush1.bf16.msra.mxu0 0
      %295 = vmatprep.subr.bf16.mxu0 0
      %296 = vmatpush1.bf16.msra.mxu0 0
      %297 = vmatprep.subr.bf16.mxu0 0
      %298 = vmatpush1.bf16.msra.mxu0 0
      %299 = vmatprep.subr.bf16.mxu0 0
      %300 = vmatpush1.bf16.msra.mxu0 0
      %301 = vmatprep.subr.bf16.mxu0 0
      %302 = vmatpush1.bf16.msra.mxu0 0
      %303 = vmatprep.mubr.bf16.mxu0 0
      %304 = vmatmul.mubr.bf16.gmra.mrb[0].mxu0 %v262
      %v305 = vpop.f32.mrb[0].mxu0
      %v306 = vadd.f32 %v223, %v305
      %v307 = vpop.f32.mrb[0].mxu0
      %v308 = vadd.f32 %v223, %v307
      %v309 = vpop.f32.mrb[0].mxu0
      %v310 = vadd.f32 %v228, %v309
      %v311 = vpop.f32.mrb[0].mxu0
      %v312 = vadd.f32 %v228, %v311
      %313 = vdwg.mxu0
      %v314 = vmul.f32 %v306, 0.2
      %v315 = vmul.f32 %v308, 0.2
      %v316 = vmax.f32 %v306, %v314
      %v317 = vmax.f32 %v308, %v315
      %v318 = vsub.f32 0.0, %v310
      %v319 = vsub.f32 0.0, %v312
      %v320 = vmul.f32 %v318, 1.442695
      %v321 = vpow.pop %v320
      %v322 = vmul.f32 %v319, 1.442695
      %v323 = vpow.pop %v322
      %v324 = vadd.f32 %v321, 1.0
      %v325 = vadd.f32 %v323, 1.0
      %v326 = vrcp.pop %v324
      %v327 = vrcp.pop %v325
      %v328 = vmul.f32 %v316, %v326
      %v329 = vmul.f32 %v317, %v327
      %330 = vst [vmem:[%s208] sm:$0xff] %v328
      %331 = vst [vmem:[%s208 + $0x8] sm:$0xff] %v329
      %s332 = smul.u32 2, %s19
      %p333 = scmp.lt.s32.totalorder %s18, 1
      %s334 = scalar_select %p333, %s18, 1
      %p335 = scmp.lt.s32.totalorder %s332, 1
      %s336 = scalar_select %p335, %s332, 1
      %s337 = smul.addr %s334, 2
      %s338 = sadd.s32 %s336, %s337
      %s339 = smul.addr %s338, 8
      %s340 = scalar_lea.vmem %s3, %s339
      // Predicated region
      $region33: #{gated_conv.1} parent=31 // pred_check
        %p341 = pneg %p116
      $region34: #{gated_conv.1} parent=31 // pred_check_branch
        %343 = sbr.rel (%p341) target = $region36
      $region35: #{gated_conv.1} parent=31 // pred_region
        %s344 = smul.u32 2, %s19
      $region36: #{gated_conv.1} parent=31 // pred_fallthru
        _
    $region32: #{gated_conv.1} parent=5 // pred_fallthru
      _
    %p345 = scmp.le.s32.totalorder 2, %s9
    // Predicated region
    $region37: #{gated_conv.1} parent=5 // pred_check
      %p346 = pneg %p345
    $region38: #{gated_conv.1} parent=5 // pred_check_branch
      %348 = sbr.rel (%p346) target = $region40
    $region39: #{gated_conv.1} parent=5 // pred_region
      %s349 = ssub.s32 %s9, 2
      // Predicated region
      $region41: #{gated_conv.1} parent=39 // pred_check
        %p350 = pneg %p122
      $region42: #{gated_conv.1} parent=39 // pred_check_branch
        %352 = sbr.rel (%p350) target = $region44
      $region43: #{gated_conv.1} parent=39 // pred_region
        %s353 = smul.u32 2, %s21
        %p354 = scmp.lt.s32.totalorder %s20, 1
        %s355 = scalar_select %p354, %s20, 1
        %p356 = scmp.lt.s32.totalorder %s353, 1
        %s357 = scalar_select %p356, %s353, 1
        %s358 = smul.addr %s355, 2
        %s359 = sadd.s32 %s357, %s358
        %s360 = smul.addr %s359, 8
        %s361 = scalar_lea.vmem %s3, %s360
      $region44: #{gated_conv.1} parent=39 // pred_fallthru
        _
    $region40: #{gated_conv.1} parent=5 // pred_fallthru
      _
  $region6: #{gated_conv.1} parent=0 // loop_footer
    %s13 = sadd.s32 1, %s9
  $region7: #{gated_conv.1} parent=0 // loop_footer_branch
    %8 = sbr.rel target = $region3
  $region8: #{gated_conv.1} parent=0 // loop_exit
    _

</llo_original>
